<compile_context>
chip_gen: v7x
topology: tpu7x:2x2x1
jax: 0.10.0
libtpu: 0.0.40
codegen_flags: <defaults>
</compile_context>

<pallas_src>
import functools

import jax
import jax.numpy as jnp
from jax.experimental import pallas as pl
from jax.experimental.pallas import tpu as pltpu


# ---------------------------------------------------------------------------
# Shared 1x1-conv MLP (hidden = C // ratio is tiny -> VPU broadcast + reduce,
# keep it off the MXU)
# ---------------------------------------------------------------------------
def _shared_mlp(v, w1, w2t):
    # v: (Nb, C), w1: (hidden, C), w2t: (hidden, C) == w2.T
    h = jnp.maximum(jnp.sum(v[:, None, :] * w1[None, :, :], axis=-1), 0.0)  # (Nb, hidden)
    return jnp.sum(h[:, :, None] * w2t[None, :, :], axis=1)                 # (Nb, C)


# ---------------------------------------------------------------------------
# Main kernel: spatial conv as dense Toeplitz matmuls (lane-dense HW layout)
# ---------------------------------------------------------------------------
def cbam_matmul_kernel(x_ref, w1_ref, w2t_ref, wa_ref, wm_ref, o_ref):
    # x_ref : (Nb, C, HW)   activations, HW on lanes
    # w1_ref: (hidden, C)   sharedMLP[0] weight
    # w2t   : (hidden, C)   sharedMLP[2] weight, transposed
    # wa/wm : (HW, HW)      7x7 conv operator for the avg / max map
    x = x_ref[...].astype(jnp.float32)                        # (Nb, C, HW)
    w1 = w1_ref[...].astype(jnp.float32)
    w2t = w2t_ref[...].astype(jnp.float32)

    # -------- channel attention --------
    avg_c = jnp.mean(x, axis=-1)                              # (Nb, C)
    max_c = jnp.max(x, axis=-1)                               # (Nb, C)
    scale = jax.nn.sigmoid(_shared_mlp(avg_c, w1, w2t) + _shared_mlp(max_c, w1, w2t))
    x = x * scale[:, :, None]                                 # channel-gated x

    # -------- spatial attention --------
    avg_s = jnp.mean(x, axis=1)                               # (Nb, HW)
    max_s = jnp.max(x, axis=1)                                # (Nb, HW)
    conv = (jnp.dot(avg_s, wa_ref[...], preferred_element_type=jnp.float32)
            + jnp.dot(max_s, wm_ref[...], preferred_element_type=jnp.float32))
    gate = jax.nn.sigmoid(conv)                               # (Nb, HW)

    o_ref[...] = (x * gate[:, None, :]).astype(o_ref.dtype)


# ---------------------------------------------------------------------------
# Fallback kernel: direct KxK conv as shifted multiply-adds (for large H*W
# where the Toeplitz operator would not fit in VMEM). Keeps (H, W) 2-D.
# ---------------------------------------------------------------------------
def cbam_direct_kernel(x_ref, w1_ref, w2t_ref, wsp_ref, o_ref, *, ksize):
    # x_ref  : (Nb, C, H, W)
    # wsp_ref: SMEM (2*K*K,) f32 conv taps, index = c*K*K + r*K + q
    nb, _, h, w = x_ref.shape
    p = ksize // 2

    x = x_ref[...].astype(jnp.float32)
    w1 = w1_ref[...].astype(jnp.float32)
    w2t = w2t_ref[...].astype(jnp.float32)

    # -------- channel attention --------
    avg_c = jnp.mean(x, axis=(2, 3))                          # (Nb, C)
    max_c = jnp.max(x, axis=(2, 3))
    scale = jax.nn.sigmoid(_shared_mlp(avg_c, w1, w2t) + _shared_mlp(max_c, w1, w2t))
    x = x * scale[:, :, None, None]

    # -------- spatial attention: zero-pad maps, accumulate 2*K*K taps (VPU) --
    avg_s = jnp.mean(x, axis=1)                               # (Nb, H, W)
    max_s = jnp.max(x, axis=1)
    conv = jnp.zeros((nb, h, w), jnp.float32)
    zrow = jnp.zeros((nb, p, w), jnp.float32)
    zcol = jnp.zeros((nb, h + 2 * p, p), jnp.float32)
    for ci, m in enumerate((avg_s, max_s)):
        mp = jnp.concatenate([zrow, m, zrow], axis=1)         # (Nb, H+2P, W)
        mp = jnp.concatenate([zcol, mp, zcol], axis=2)        # (Nb, H+2P, W+2P)
        for di in range(ksize):
            for dj in range(ksize):
                tap = wsp_ref[ci * ksize * ksize + di * ksize + dj]  # SMEM scalar
                conv = conv + tap * mp[:, di:di + h, dj:dj + w]
    gate = jax.nn.sigmoid(conv)                               # (Nb, H, W)

    o_ref[...] = (x * gate[:, None, :, :]).astype(o_ref.dtype)


# ---------------------------------------------------------------------------
# Host-side precompute: lower the 2->1 channel KxK conv (padding=K//2) to a
# dense matmul operator:  conv(maps)_flat = maps_flat @ op,  op: (2*H*W, H*W)
#   op[c*HW + r*W + q, i*W + j] = wsp[0, c, r-i+P, q-j+P]  (0 outside kernel)
# ---------------------------------------------------------------------------
def spatial_conv_operator(wsp, H, W):
    K = wsp.shape[-1]
    P = K // 2
    w = wsp[0].astype(jnp.float32)                             # (2, K, K)
    ki = jnp.arange(H)[:, None] - jnp.arange(H)[None, :] + P   # (H, H): r - i + P
    kj = jnp.arange(W)[:, None] - jnp.arange(W)[None, :] + P   # (W, W): q - j + P
    vi = (ki >= 0) & (ki < K)
    vj = (kj >= 0) & (kj < K)
    op = w[:, jnp.clip(ki, 0, K - 1)[:, :, None, None],
              jnp.clip(kj, 0, K - 1)[None, None, :, :]]        # (2, H, H, W, W) [c,r,i,q,j]
    op = jnp.where((vi[:, :, None, None] & vj[None, None, :, :])[None, ...], op, 0.0)
    op = op.transpose(0, 1, 3, 2, 4)                           # [c, r, q, i, j]
    return op.reshape(2 * H * W, H * W)


# ---------------------------------------------------------------------------
# Best-effort: TensorCores per chip (2 on v7x, 1 on v5e/v6e). Safe default 1.
# ---------------------------------------------------------------------------
def _num_tensorcores():
    try:
        info = pltpu.get_tpu_info()
    except Exception:
        return 1
    for attr in ("num_tensorcores", "tensorcore_count", "tensor_core_count",
                 "cores_per_chip", "num_cores"):
        v = getattr(info, attr, None)
        if v is None:
            continue
        try:
            v = int(v)
        except (TypeError, ValueError):
            continue
        if 1 <= v <= 8:
            return v
    return 1


# ---------------------------------------------------------------------------
# Wrapper
# ---------------------------------------------------------------------------
def cbam_forward(x, w1, w2, wsp, *, block_n=None, spatial_conv="auto",
                 num_tensorcores=None):
    N, C, H, W = x.shape
    hidden = w1.shape[0]
    K = wsp.shape[-1]
    HW = H * W
    itemsize = x.dtype.itemsize

    # Toeplitz operator is O(HW^2) VMEM -> switch to the direct conv when it
    # would eat too much of v7x's 64 MiB VMEM/TC.
    if spatial_conv == "auto":
        spatial_conv = "matmul" if 2 * HW * HW * 4 <= (16 << 20) else "direct"
    use_matmul = spatial_conv == "matmul"

    num_tc = num_tensorcores if num_tensorcores is not None else _num_tensorcores()

    # ---------------- VMEM budgeting & block size ----------------
    weight_bytes = 2 * hidden * C * 4 + (2 * HW * HW * 4 if use_matmul else 0)
    per_batch_io = C * HW * itemsize            # one batch of x in I/O dtype
    per_batch_f32 = C * HW * 4                  # one batch of x as f32 in-body
    # 2x double-buffered input + 2x output windows + ~4 f32-sized temporaries.
    per_batch_vmem = 4 * per_batch_io + 4 * per_batch_f32

    if block_n is None:
        # HBM-bound kernel: target ~4 MiB of x per grid step.
        block_n = max(1, (4 << 20) // max(per_batch_io, 1))
        vmem_budget = (44 << 20) - weight_bytes     # keep under v7x 64 MiB/TC
        block_n = min(block_n, max(1, vmem_budget // max(per_batch_vmem, 1)))
        # Only split the batch when there are multiple TensorCores to feed
        # (v7x); on 1-TC chips (v5e/v6e) splitting is pure per-step overhead.
        if num_tc > 1 and N > 1:
            block_n = min(block_n, pl.cdiv(N, num_tc))
    block_n = int(max(1, min(block_n, N)))

    grid_n = pl.cdiv(N, block_n)
    n_pad = grid_n * block_n

    vmem_est = weight_bytes + block_n * per_batch_vmem + (1 << 20)
    vmem_limit = int(min(max(int(1.5 * vmem_est), 32 << 20), 56 << 20))
    compiler_params = pltpu.CompilerParams(
        dimension_semantics=("parallel",), vmem_limit_bytes=vmem_limit)

    w2t = w2.T
    x_in = x.reshape(N, C, HW) if use_matmul else x
    if n_pad != N:
        # Pad the batch so every block is full; padded rows are discarded.
        x_in = jnp.pad(x_in, [(0, n_pad - N)] + [(0, 0)] * (x_in.ndim - 1))

    # Weights never change across grid steps -> single-buffer them.
    def _wspec(shape):
        return pl.BlockSpec(shape, lambda n: (0,) * len(shape),
                            pipeline_mode=pl.Buffered(1))

    if use_matmul:
        wop = spatial_conv_operator(wsp, H, W)                 # (2*HW, HW) f32
        out = pl.pallas_call(
            cbam_matmul_kernel,
            grid=(grid_n,),
            in_specs=[
                pl.BlockSpec((block_n, C, HW), lambda n: (n, 0, 0)),
                _wspec((hidden, C)),
                _wspec((hidden, C)),
                _wspec((HW, HW)),
                _wspec((HW, HW)),
            ],
            out_specs=pl.BlockSpec((block_n, C, HW), lambda n: (n, 0, 0)),
            out_shape=jax.ShapeDtypeStruct((n_pad, C, HW), x.dtype),
            compiler_params=compiler_params,
        )(x_in, w1, w2t, wop[:HW], wop[HW:])
        return out[:N].reshape(N, C, H, W)
    else:
        wflat = wsp.reshape(-1).astype(jnp.float32)            # (2*K*K,) taps
        out = pl.pallas_call(
            functools.partial(cbam_direct_kernel, ksize=K),
            grid=(grid_n,),
            in_specs=[
                pl.BlockSpec((block_n, C, H, W), lambda n: (n, 0, 0, 0)),
                _wspec((hidden, C)),
                _wspec((hidden, C)),
                pl.BlockSpec(memory_space=pltpu.MemorySpace.SMEM),
            ],
            out_specs=pl.BlockSpec((block_n, C, H, W), lambda n: (n, 0, 0, 0)),
            out_shape=jax.ShapeDtypeStruct((n_pad, C, H, W), x.dtype),
            compiler_params=compiler_params,
        )(x_in, w1, w2t, wflat)
        return out[:N]


# ---------------------------------------------------------------------------
# Pure-JAX reference (mirrors the PyTorch module)
# ---------------------------------------------------------------------------
def cbam_ref(x, w1, w2, wsp):
    avg = x.mean(axis=(2, 3))                   # (N, C)
    mx = x.max(axis=(2, 3))                     # (N, C)

    def mlp(v):
        return jnp.maximum(v @ w1.T, 0.0) @ w2.T

    ca = jax.nn.sigmoid(mlp(avg) + mlp(mx))[:, :, None, None]
    x1 = x * ca

    avg_s = x1.mean(axis=1, keepdims=True)
    max_s = x1.max(axis=1, keepdims=True)
    inp = jnp.concatenate([avg_s, max_s], axis=1)  # (N, 2, H, W)
    pad = wsp.shape[-1] // 2
    conv = jax.lax.conv_general_dilated(
        inp, wsp, window_strides=(1, 1), padding=[(pad, pad), (pad, pad)],
        dimension_numbers=("NCHW", "OIHW", "NCHW"))
    return x1 * jax.nn.sigmoid(conv)


if __name__ == "__main__":
    # CBAM(in_channels=32, ratio=16, kernel_size=7)
    N, C, H, W = 2, 32, 16, 16
    ratio = 16
    hidden = C // ratio                          # = 2

    key = jax.random.PRNGKey(0)
    kx, k1, k2, k3 = jax.random.split(key, 4)
    x = jax.random.normal(kx, (N, C, H, W), jnp.float32)
    w1 = jax.random.normal(k1, (hidden, C), jnp.float32) * 0.2    # sharedMLP[0]
    w2 = jax.random.normal(k2, (C, hidden), jnp.float32) * 0.2    # sharedMLP[2]
    wsp = jax.random.normal(k3, (1, 2, 7, 7), jnp.float32) * 0.2  # spatial conv

    ref = cbam_ref(x, w1, w2, wsp)

    # Main path: Toeplitz-matmul spatial conv, lane-dense HW layout.
    out = jax.block_until_ready(jax.jit(cbam_forward)(x, w1, w2, wsp))
    assert out.shape == ref.shape
    err = jnp.max(jnp.abs(out - ref))
    assert jnp.allclose(out, ref, atol=1e-3, rtol=1e-3), f"matmul path err = {err}"

    # Fallback path (used automatically when 8*HW^2 would blow VMEM).
    out_d = jax.block_until_ready(
        jax.jit(functools.partial(cbam_forward, spatial_conv="direct"))(x, w1, w2, wsp))
    err_d = jnp.max(jnp.abs(out_d - ref))
    assert jnp.allclose(out_d, ref, atol=1e-3, rtol=1e-3), f"direct path err = {err_d}"

    # bf16 I/O path (compute stays f32 inside the kernel).
    xb = x.astype(jnp.bfloat16)
    out_b = jax.block_until_ready(jax.jit(cbam_forward)(xb, w1, w2, wsp))
    ref_b = cbam_ref(xb.astype(jnp.float32), w1, w2, wsp)
    assert out_b.dtype == jnp.bfloat16
    assert jnp.allclose(out_b.astype(jnp.float32), ref_b, atol=3e-2, rtol=3e-2)

    print("KERNEL_OK")
</pallas_src>

<mosaic_0001>
module attributes {stable_mosaic.version = 11 : i64} {
  func.func @cbam_matmul_kernel(%arg0: i32, %arg1: memref<2x32x256xf32, #tpu.memory_space<vmem>>, %arg2: memref<2x32xf32, #tpu.memory_space<vmem>>, %arg3: memref<2x32xf32, #tpu.memory_space<vmem>>, %arg4: memref<256x256xf32, #tpu.memory_space<vmem>>, %arg5: memref<256x256xf32, #tpu.memory_space<vmem>>, %arg6: memref<2x32x256xf32, #tpu.memory_space<vmem>>) attributes {dimension_semantics = [#tpu.dimension_semantics<parallel>], iteration_bounds = array<i64: 1>, scalar_prefetch = 0 : i64, scratch_operands = 0 : i64, tpu.core_type = #tpu.core_type<tc>, window_params = [{transform_indices = @transform_0, window_bounds = array<i64: 2, 32, 256>}, {pipeline_mode = #tpu.pipeline_mode<synchronous>, transform_indices = @transform_1, window_bounds = array<i64: 2, 32>}, {pipeline_mode = #tpu.pipeline_mode<synchronous>, transform_indices = @transform_2, window_bounds = array<i64: 2, 32>}, {pipeline_mode = #tpu.pipeline_mode<synchronous>, transform_indices = @transform_3, window_bounds = array<i64: 256, 256>}, {pipeline_mode = #tpu.pipeline_mode<synchronous>, transform_indices = @transform_4, window_bounds = array<i64: 256, 256>}, {transform_indices = @transform_5, window_bounds = array<i64: 2, 32, 256>}]} {
    %c0 = arith.constant 0 : index
    %c0_0 = arith.constant 0 : index
    %c0_1 = arith.constant 0 : index
    %0 = vector.load %arg1[%c0, %c0_0, %c0_1] : memref<2x32x256xf32, #tpu.memory_space<vmem>>, vector<2x32x256xf32>
    %c0_2 = arith.constant 0 : index
    %c0_3 = arith.constant 0 : index
    %1 = vector.load %arg2[%c0_2, %c0_3] : memref<2x32xf32, #tpu.memory_space<vmem>>, vector<2x32xf32>
    %c0_4 = arith.constant 0 : index
    %c0_5 = arith.constant 0 : index
    %2 = vector.load %arg3[%c0_4, %c0_5] : memref<2x32xf32, #tpu.memory_space<vmem>>, vector<2x32xf32>
    %cst = arith.constant dense<0.000000e+00> : vector<2x32xf32>
    %3 = vector.multi_reduction <add>, %0, %cst [2] : vector<2x32x256xf32> to vector<2x32xf32>
    %cst_6 = arith.constant 2.560000e+02 : f32
    %4 = vector.broadcast %cst_6 : f32 to vector<2x32xf32>
    %5 = arith.divf %3, %4 : vector<2x32xf32>
    %cst_7 = arith.constant dense<0xFF800000> : vector<2x32xf32>
    %6 = vector.multi_reduction <maximumf>, %0, %cst_7 [2] : vector<2x32x256xf32> to vector<2x32xf32>
    %7 = vector.shape_cast %5 : vector<2x32xf32> to vector<2x1x32xf32>
    %8 = vector.shape_cast %1 : vector<2x32xf32> to vector<1x2x32xf32>
    %9 = vector.broadcast %7 : vector<2x1x32xf32> to vector<2x2x32xf32>
    %10 = vector.broadcast %8 : vector<1x2x32xf32> to vector<2x2x32xf32>
    %11 = arith.mulf %9, %10 : vector<2x2x32xf32>
    %cst_8 = arith.constant dense<0.000000e+00> : vector<2x2xf32>
    %12 = vector.multi_reduction <add>, %11, %cst_8 [2] : vector<2x2x32xf32> to vector<2x2xf32>
    %cst_9 = arith.constant 0.000000e+00 : f32
    %13 = vector.broadcast %cst_9 : f32 to vector<2x2xf32>
    %14 = arith.maximumf %12, %13 : vector<2x2xf32>
    %15 = vector.shape_cast %14 : vector<2x2xf32> to vector<2x2x1xf32>
    %16 = vector.shape_cast %2 : vector<2x32xf32> to vector<1x2x32xf32>
    %17 = vector.broadcast %15 : vector<2x2x1xf32> to vector<2x2x32xf32>
    %18 = vector.broadcast %16 : vector<1x2x32xf32> to vector<2x2x32xf32>
    %19 = arith.mulf %17, %18 : vector<2x2x32xf32>
    %cst_10 = arith.constant dense<0.000000e+00> : vector<2x32xf32>
    %20 = vector.multi_reduction <add>, %19, %cst_10 [1] : vector<2x2x32xf32> to vector<2x32xf32>
    %21 = vector.shape_cast %6 : vector<2x32xf32> to vector<2x1x32xf32>
    %22 = vector.shape_cast %1 : vector<2x32xf32> to vector<1x2x32xf32>
    %23 = vector.broadcast %21 : vector<2x1x32xf32> to vector<2x2x32xf32>
    %24 = vector.broadcast %22 : vector<1x2x32xf32> to vector<2x2x32xf32>
    %25 = arith.mulf %23, %24 : vector<2x2x32xf32>
    %cst_11 = arith.constant dense<0.000000e+00> : vector<2x2xf32>
    %26 = vector.multi_reduction <add>, %25, %cst_11 [2] : vector<2x2x32xf32> to vector<2x2xf32>
    %cst_12 = arith.constant 0.000000e+00 : f32
    %27 = vector.broadcast %cst_12 : f32 to vector<2x2xf32>
    %28 = arith.maximumf %26, %27 : vector<2x2xf32>
    %29 = vector.shape_cast %28 : vector<2x2xf32> to vector<2x2x1xf32>
    %30 = vector.shape_cast %2 : vector<2x32xf32> to vector<1x2x32xf32>
    %31 = vector.broadcast %29 : vector<2x2x1xf32> to vector<2x2x32xf32>
    %32 = vector.broadcast %30 : vector<1x2x32xf32> to vector<2x2x32xf32>
    %33 = arith.mulf %31, %32 : vector<2x2x32xf32>
    %cst_13 = arith.constant dense<0.000000e+00> : vector<2x32xf32>
    %34 = vector.multi_reduction <add>, %33, %cst_13 [1] : vector<2x2x32xf32> to vector<2x32xf32>
    %35 = arith.addf %20, %34 : vector<2x32xf32>
    %36 = arith.negf %35 : vector<2x32xf32>
    %37 = math.exp %36 : vector<2x32xf32>
    %cst_14 = arith.constant 1.000000e+00 : f32
    %38 = vector.broadcast %cst_14 : f32 to vector<2x32xf32>
    %39 = arith.addf %38, %37 : vector<2x32xf32>
    %40 = arith.divf %38, %39 : vector<2x32xf32>
    %41 = vector.shape_cast %40 : vector<2x32xf32> to vector<2x32x1xf32>
    %42 = vector.broadcast %41 : vector<2x32x1xf32> to vector<2x32x256xf32>
    %43 = arith.mulf %0, %42 : vector<2x32x256xf32>
    %cst_15 = arith.constant dense<0.000000e+00> : vector<2x256xf32>
    %44 = vector.multi_reduction <add>, %43, %cst_15 [1] : vector<2x32x256xf32> to vector<2x256xf32>
    %cst_16 = arith.constant 3.200000e+01 : f32
    %45 = vector.broadcast %cst_16 : f32 to vector<2x256xf32>
    %46 = arith.divf %44, %45 : vector<2x256xf32>
    %cst_17 = arith.constant dense<0xFF800000> : vector<2x256xf32>
    %47 = vector.multi_reduction <maximumf>, %43, %cst_17 [1] : vector<2x32x256xf32> to vector<2x256xf32>
    %c0_18 = arith.constant 0 : index
    %c0_19 = arith.constant 0 : index
    %48 = vector.load %arg4[%c0_18, %c0_19] : memref<256x256xf32, #tpu.memory_space<vmem>>, vector<256x256xf32>
    %cst_20 = arith.constant dense<0.000000e+00> : vector<2x256xf32>
    %49 = tpu.matmul %46, %48, %cst_20 {dimension_numbers = #tpu.dot_dimension_numbers<[1], [0], [0], [1], [0, 0, 1, 1], [], []>} : vector<2x256xf32>, vector<256x256xf32>, vector<2x256xf32> -> vector<2x256xf32>
    %c0_21 = arith.constant 0 : index
    %c0_22 = arith.constant 0 : index
    %50 = vector.load %arg5[%c0_21, %c0_22] : memref<256x256xf32, #tpu.memory_space<vmem>>, vector<256x256xf32>
    %cst_23 = arith.constant dense<0.000000e+00> : vector<2x256xf32>
    %51 = tpu.matmul %47, %50, %cst_23 {dimension_numbers = #tpu.dot_dimension_numbers<[1], [0], [0], [1], [0, 0, 1, 1], [], []>} : vector<2x256xf32>, vector<256x256xf32>, vector<2x256xf32> -> vector<2x256xf32>
    %52 = arith.addf %49, %51 : vector<2x256xf32>
    %53 = arith.negf %52 : vector<2x256xf32>
    %54 = math.exp %53 : vector<2x256xf32>
    %cst_24 = arith.constant 1.000000e+00 : f32
    %55 = vector.broadcast %cst_24 : f32 to vector<2x256xf32>
    %56 = arith.addf %55, %54 : vector<2x256xf32>
    %57 = arith.divf %55, %56 : vector<2x256xf32>
    %58 = vector.shape_cast %57 : vector<2x256xf32> to vector<2x1x256xf32>
    %59 = vector.broadcast %58 : vector<2x1x256xf32> to vector<2x32x256xf32>
    %60 = arith.mulf %43, %59 : vector<2x32x256xf32>
    %c0_25 = arith.constant 0 : index
    %c0_26 = arith.constant 0 : index
    %c0_27 = arith.constant 0 : index
    %61 = vector.load %arg6[%c0_25, %c0_26, %c0_27] : memref<2x32x256xf32, #tpu.memory_space<vmem>>, vector<2x32x256xf32>
    tpu.vector_store %arg6[%c0_25, %c0_26, %c0_27], %60 {strides = array<i32>} : memref<2x32x256xf32, #tpu.memory_space<vmem>>, vector<2x32x256xf32>,
    return
  }
  func.func @transform_0(%arg0: i32) -> (i32, i32, i32) {
    %c0_i32 = arith.constant 0 : i32
    %c0_i32_0 = arith.constant 0 : i32
    %c0_i32_1 = arith.constant 0 : i32
    return %arg0, %c0_i32, %c0_i32_0 : i32, i32, i32
  }
  func.func @transform_1(%arg0: i32) -> (i32, i32) {
    %c0_i32 = arith.constant 0 : i32
    %c0_i32_0 = arith.constant 0 : i32
    %c0_i32_1 = arith.constant 0 : i32
    return %c0_i32, %c0_i32_0 : i32, i32
  }
  func.func @transform_2(%arg0: i32) -> (i32, i32) {
    %c0_i32 = arith.constant 0 : i32
    %c0_i32_0 = arith.constant 0 : i32
    %c0_i32_1 = arith.constant 0 : i32
    return %c0_i32, %c0_i32_0 : i32, i32
  }
  func.func @transform_3(%arg0: i32) -> (i32, i32) {
    %c0_i32 = arith.constant 0 : i32
    %c0_i32_0 = arith.constant 0 : i32
    %c0_i32_1 = arith.constant 0 : i32
    return %c0_i32, %c0_i32_0 : i32, i32
  }
  func.func @transform_4(%arg0: i32) -> (i32, i32) {
    %c0_i32 = arith.constant 0 : i32
    %c0_i32_0 = arith.constant 0 : i32
    %c0_i32_1 = arith.constant 0 : i32
    return %c0_i32, %c0_i32_0 : i32, i32
  }
  func.func @transform_5(%arg0: i32) -> (i32, i32, i32) {
    %c0_i32 = arith.constant 0 : i32
    %c0_i32_0 = arith.constant 0 : i32
    %c0_i32_1 = arith.constant 0 : i32
    return %arg0, %c0_i32, %c0_i32_0 : i32, i32, i32
  }
}

</mosaic_0001>

<llo_original>
// kernel: cbam_forward.1
$region0: #{cbam_forward.1}
  #allocation0 [shape = 'u32[]', space=smem, size = 0x4, offset = 0x4, fixed_abs, tag = 'smem constant byte address 0x4 - core index']
  #allocation1 [shape = 'u32[144,128]{1,0:T(1,128)}', space=vmem, size = 0x12000, scoped, tag = 'internal scratch']
  %s0 = inlined_call_operand.vmem [shape: f32[2,32,256], index: 0, kind: input, shape index: {}]
  %s1 = inlined_call_operand.vmem [shape: f32[2,32], index: 1, kind: input, shape index: {}]
  %s2 = inlined_call_operand.vmem [shape: f32[2,32], index: 2, kind: input, shape index: {}]
  %s3 = inlined_call_operand.vmem [shape: f32[256,256], index: 3, kind: input, shape index: {}]
  %s4 = inlined_call_operand.vmem [shape: f32[256,256], index: 4, kind: input, shape index: {}]
  %s5 = inlined_call_operand.vmem [shape: f32[2,32,256], index: 5, kind: output, shape index: {}]
  %s6 = sld [smem:[#allocation0]]
  $region30: #{cbam_forward.1} parent=0
    _
  %s8 = ssub.s32 1, %s6
  %s9 = scalar_select 0, %s8, %s6
  // Predicated region
  $region2: #{cbam_forward.1} parent=0 // pred_check
    _
  $region3: #{cbam_forward.1} parent=0 // pred_check_branch
    %11 = sbr.rel (0) target = $region5
  $region4: #{cbam_forward.1} parent=0 // pred_region
    _
  $region5: #{cbam_forward.1} parent=0 // pred_fallthru
    _
  // Predicated region
  $region6: #{cbam_forward.1} parent=0 // pred_check
    _
  $region7: #{cbam_forward.1} parent=0 // pred_check_branch
    %13 = sbr.rel (0) target = $region9
  $region8: #{cbam_forward.1} parent=0 // pred_region
    _
  $region9: #{cbam_forward.1} parent=0 // pred_fallthru
    _
  // Predicated region
  $region10: #{cbam_forward.1} parent=0 // pred_check
    _
  $region11: #{cbam_forward.1} parent=0 // pred_check_branch
    %15 = sbr.rel (0) target = $region13
  $region12: #{cbam_forward.1} parent=0 // pred_region
    _
  $region13: #{cbam_forward.1} parent=0 // pred_fallthru
    _
  // Predicated region
  $region14: #{cbam_forward.1} parent=0 // pred_check
    _
  $region15: #{cbam_forward.1} parent=0 // pred_check_branch
    %17 = sbr.rel (0) target = $region17
  $region16: #{cbam_forward.1} parent=0 // pred_region
    _
  $region17: #{cbam_forward.1} parent=0 // pred_fallthru
    _
  // Predicated region
  $region18: #{cbam_forward.1} parent=0 // pred_check
    _
  $region19: #{cbam_forward.1} parent=0 // pred_check_branch
    %19 = sbr.rel (0) target = $region21
  $region20: #{cbam_forward.1} parent=0 // pred_region
    _
  $region21: #{cbam_forward.1} parent=0 // pred_fallthru
    _
  %v20 = vld [vmem:[%s0] sm:$0xff]
  %v21 = vld [vmem:[%s0 + $0x8] sm:$0xff]
  %v22 = vld [vmem:[%s0 + $0x10] sm:$0xff]
  %v23 = vld [vmem:[%s0 + $0x18] sm:$0xff]
  %v24 = vld [vmem:[%s0 + $0x20] sm:$0xff]
  %v25 = vld [vmem:[%s0 + $0x28] sm:$0xff]
  %v26 = vld [vmem:[%s0 + $0x30] sm:$0xff]
  %v27 = vld [vmem:[%s0 + $0x38] sm:$0xff]
  %v28 = vld [vmem:[%s0 + $0x40] sm:$0xff]
  %v29 = vld [vmem:[%s0 + $0x48] sm:$0xff]
  %v30 = vld [vmem:[%s0 + $0x50] sm:$0xff]
  %v31 = vld [vmem:[%s0 + $0x58] sm:$0xff]
  %v32 = vld [vmem:[%s0 + $0x60] sm:$0xff]
  %v33 = vld [vmem:[%s0 + $0x68] sm:$0xff]
  %v34 = vld [vmem:[%s0 + $0x70] sm:$0xff]
  %v35 = vld [vmem:[%s0 + $0x78] sm:$0xff]
  %v36 = vld [vmem:[%s1] sm:$0x3]
  %v37 = vld [vmem:[%s2] sm:$0x3]
  %v38 = vadd.f32 %v20, %v21
  %39 = vadd.xlane.f32.xlu0 %v38
  %v40 = vpop.xlane.xlu0 %39
  %v41 = vadd.f32 %v22, %v23
  %42 = vadd.xlane.f32.xlu0 %v41
  %v43 = vpop.xlane.xlu0 %42
  %v44 = vadd.f32 %v24, %v25
  %45 = vadd.xlane.f32.xlu0 %v44
  %v46 = vpop.xlane.xlu0 %45
  %v47 = vadd.f32 %v26, %v27
  %48 = vadd.xlane.f32.xlu0 %v47
  %v49 = vpop.xlane.xlu0 %48
  %v50 = vadd.f32 %v28, %v29
  %51 = vadd.xlane.f32.xlu0 %v50
  %v52 = vpop.xlane.xlu0 %51
  %v53 = vadd.f32 %v30, %v31
  %54 = vadd.xlane.f32.xlu0 %v53
  %v55 = vpop.xlane.xlu0 %54
  %v56 = vadd.f32 %v32, %v33
  %57 = vadd.xlane.f32.xlu0 %v56
  %v58 = vpop.xlane.xlu0 %57
  %v59 = vadd.f32 %v34, %v35
  %60 = vadd.xlane.f32.xlu0 %v59
  %v61 = vpop.xlane.xlu0 %60
  %v62 = vrcp.pop 256.0
  %v63 = vmul.f32 %v40, %v62
  %v64 = vmul.f32 %v43, %v62
  %v65 = vmul.f32 %v46, %v62
  %v66 = vmul.f32 %v49, %v62
  %v67 = vmul.f32 %v52, %v62
  %v68 = vmul.f32 %v55, %v62
  %v69 = vmul.f32 %v58, %v62
  %v70 = vmul.f32 %v61, %v62
  %v71 = vmax.f32 %v20, %v21
  %72 = vmax.xlane.f32.xlu0 %v71
  %v73 = vpop.xlane.xlu0 %72
  %v74 = vmax.f32 %v22, %v23
  %75 = vmax.xlane.f32.xlu0 %v74
  %v76 = vpop.xlane.xlu0 %75
  %v77 = vmax.f32 %v24, %v25
  %78 = vmax.xlane.f32.xlu0 %v77
  %v79 = vpop.xlane.xlu0 %78
  %v80 = vmax.f32 %v26, %v27
  %81 = vmax.xlane.f32.xlu0 %v80
  %v82 = vpop.xlane.xlu0 %81
  %v83 = vmax.f32 %v28, %v29
  %84 = vmax.xlane.f32.xlu0 %v83
  %v85 = vpop.xlane.xlu0 %84
  %v86 = vmax.f32 %v30, %v31
  %87 = vmax.xlane.f32.xlu0 %v86
  %v88 = vpop.xlane.xlu0 %87
  %v89 = vmax.f32 %v32, %v33
  %90 = vmax.xlane.f32.xlu0 %v89
  %v91 = vpop.xlane.xlu0 %90
  %v92 = vmax.f32 %v34, %v35
  %93 = vmax.xlane.f32.xlu0 %v92
  %v94 = vpop.xlane.xlu0 %93
  %v96 = vlaneseq
  %v97 = vshrl.u32 %v96, 7
  %v98 = vsub.s32 0, %v97
  %v99 = vrot.slane %v36, %v98
  %101 = vbcast.lane.b32.xlu0 %v99, 256
  %v102 = vpop.permute.xlu0 %101
  %s104 = sor.u32 256, 8
  %105 = vbcast.lane.b32.xlu0 %v99, %s104
  %v106 = vpop.permute.xlu0 %105
  %s108 = sor.u32 256, 16
  %109 = vbcast.lane.b32.xlu0 %v99, %s108
  %v110 = vpop.permute.xlu0 %109
  %s112 = sor.u32 256, 24
  %113 = vbcast.lane.b32.xlu0 %v99, %s112
  %v114 = vpop.permute.xlu0 %113
  %v115 = vlaneseq
  %v116 = vshrl.u32 %v115, 7
  %v117 = vsub.s32 1, %v116
  %v118 = vrot.slane %v36, %v117
  %120 = vbcast.lane.b32.xlu0 %v118, 256
  %v121 = vpop.permute.xlu0 %120
  %s123 = sor.u32 256, 8
  %124 = vbcast.lane.b32.xlu0 %v118, %s123
  %v125 = vpop.permute.xlu0 %124
  %s127 = sor.u32 256, 16
  %128 = vbcast.lane.b32.xlu0 %v118, %s127
  %v129 = vpop.permute.xlu0 %128
  %s131 = sor.u32 256, 24
  %132 = vbcast.lane.b32.xlu0 %v118, %s131
  %v133 = vpop.permute.xlu0 %132
  %v142 = vmul.f32 %v63, %v102
  %v143 = vmul.f32 %v64, %v106
  %v144 = vmul.f32 %v65, %v110
  %v145 = vmul.f32 %v66, %v114
  %v146 = vmul.f32 %v63, %v121
  %v147 = vmul.f32 %v64, %v125
  %v148 = vmul.f32 %v65, %v129
  %v149 = vmul.f32 %v66, %v133
  %v150 = vmul.f32 %v67, %v102
  %v151 = vmul.f32 %v68, %v106
  %v152 = vmul.f32 %v69, %v110
  %v153 = vmul.f32 %v70, %v114
  %v154 = vmul.f32 %v67, %v121
  %v155 = vmul.f32 %v68, %v125
  %v156 = vmul.f32 %v69, %v129
  %v157 = vmul.f32 %v70, %v133
  %174 = vset.pattern.permute.xlu0 0
  %175 = vperm.xlu0 %174, %v142
  %v176 = vpop.permute.xlu0 %175
  %177 = vset.pattern.permute.xlu0 0
  %178 = vperm.xlu0 %177, %v143
  %v179 = vpop.permute.xlu0 %178
  %180 = vset.pattern.permute.xlu0 0
  %181 = vperm.xlu0 %180, %v144
  %v182 = vpop.permute.xlu0 %181
  %183 = vset.pattern.permute.xlu0 0
  %184 = vperm.xlu0 %183, %v145
  %v185 = vpop.permute.xlu0 %184
  %186 = vset.pattern.permute.xlu0 0
  %187 = vperm.xlu0 %186, %v146
  %v188 = vpop.permute.xlu0 %187
  %189 = vset.pattern.permute.xlu0 0
  %190 = vperm.xlu0 %189, %v147
  %v191 = vpop.permute.xlu0 %190
  %192 = vset.pattern.permute.xlu0 0
  %193 = vperm.xlu0 %192, %v148
  %v194 = vpop.permute.xlu0 %193
  %195 = vset.pattern.permute.xlu0 0
  %196 = vperm.xlu0 %195, %v149
  %v197 = vpop.permute.xlu0 %196
  %198 = vset.pattern.permute.xlu0 0
  %199 = vperm.xlu0 %198, %v150
  %v200 = vpop.permute.xlu0 %199
  %201 = vset.pattern.permute.xlu0 0
  %202 = vperm.xlu0 %201, %v151
  %v203 = vpop.permute.xlu0 %202
  %204 = vset.pattern.permute.xlu0 0
  %205 = vperm.xlu0 %204, %v152
  %v206 = vpop.permute.xlu0 %205
  %207 = vset.pattern.permute.xlu0 0
  %208 = vperm.xlu0 %207, %v153
  %v209 = vpop.permute.xlu0 %208
  %210 = vset.pattern.permute.xlu0 0
  %211 = vperm.xlu0 %210, %v154
  %v212 = vpop.permute.xlu0 %211
  %213 = vset.pattern.permute.xlu0 0
  %214 = vperm.xlu0 %213, %v155
  %v215 = vpop.permute.xlu0 %214
  %216 = vset.pattern.permute.xlu0 0
  %217 = vperm.xlu0 %216, %v156
  %v218 = vpop.permute.xlu0 %217
  %219 = vset.pattern.permute.xlu0 0
  %220 = vperm.xlu0 %219, %v157
  %v221 = vpop.permute.xlu0 %220
  %v222 = vlaneseq
  %v223 = vand.u32 %v222, 127
  %v224 = vlaneseq
  %v225 = vshrl.u32 %v224, 7
  %v226 = vsub.s32 %v223, %v225
  %v227 = vrot.slane %v176, %v226
  %v228 = vadd.s32 %v223, 4294967288
  %v229 = vlaneseq
  %v230 = vshrl.u32 %v229, 7
  %v231 = vsub.s32 %v228, %v230
  %v232 = vrot.slane %v179, %v231
  %vm233 = vcmask 130112
  %v234 = vsel %vm233, %v232, %v227
  %v235 = vadd.s32 %v223, 4294967280
  %v236 = vlaneseq
  %v237 = vshrl.u32 %v236, 7
  %v238 = vsub.s32 %v235, %v237
  %v239 = vrot.slane %v182, %v238
  %vm240 = vcmask 195712
  %v241 = vsel %vm240, %v239, %v234
  %v242 = vadd.s32 %v223, 4294967272
  %v243 = vlaneseq
  %v244 = vshrl.u32 %v243, 7
  %v245 = vsub.s32 %v242, %v244
  %v246 = vrot.slane %v185, %v245
  %vm247 = vcmask 261312
  %v248 = vsel %vm247, %v246, %v241
  %v249 = vlaneseq
  %v250 = vshrl.u32 %v249, 7
  %v251 = vsub.s32 %v223, %v250
  %v252 = vrot.slane %v188, %v251
  %v253 = vlaneseq
  %v254 = vshrl.u32 %v253, 7
  %v255 = vsub.s32 %v228, %v254
  %v256 = vrot.slane %v191, %v255
  %v257 = vsel %vm233, %v256, %v252
  %v258 = vlaneseq
  %v259 = vshrl.u32 %v258, 7
  %v260 = vsub.s32 %v235, %v259
  %v261 = vrot.slane %v194, %v260
  %v262 = vsel %vm240, %v261, %v257
  %v263 = vlaneseq
  %v264 = vshrl.u32 %v263, 7
  %v265 = vsub.s32 %v242, %v264
  %v266 = vrot.slane %v197, %v265
  %v267 = vsel %vm247, %v266, %v262
  %v268 = vlaneseq
  %v269 = vshrl.u32 %v268, 7
  %v270 = vsub.s32 %v223, %v269
  %v271 = vrot.slane %v200, %v270
  %v272 = vlaneseq
  %v273 = vshrl.u32 %v272, 7
  %v274 = vsub.s32 %v228, %v273
  %v275 = vrot.slane %v203, %v274
  %v276 = vsel %vm233, %v275, %v271
  %v277 = vlaneseq
  %v278 = vshrl.u32 %v277, 7
  %v279 = vsub.s32 %v235, %v278
  %v280 = vrot.slane %v206, %v279
  %v281 = vsel %vm240, %v280, %v276
  %v282 = vlaneseq
  %v283 = vshrl.u32 %v282, 7
  %v284 = vsub.s32 %v242, %v283
  %v285 = vrot.slane %v209, %v284
  %v286 = vsel %vm247, %v285, %v281
  %v287 = vlaneseq
  %v288 = vshrl.u32 %v287, 7
  %v289 = vsub.s32 %v223, %v288
  %v290 = vrot.slane %v212, %v289
  %v291 = vlaneseq
  %v292 = vshrl.u32 %v291, 7
  %v293 = vsub.s32 %v228, %v292
  %v294 = vrot.slane %v215, %v293
  %v295 = vsel %vm233, %v294, %v290
  %v296 = vlaneseq
  %v297 = vshrl.u32 %v296, 7
  %v298 = vsub.s32 %v235, %v297
  %v299 = vrot.slane %v218, %v298
  %v300 = vsel %vm240, %v299, %v295
  %v301 = vlaneseq
  %v302 = vshrl.u32 %v301, 7
  %v303 = vsub.s32 %v242, %v302
  %v304 = vrot.slane %v221, %v303
  %v305 = vsel %vm247, %v304, %v300
  %vm306 = vcmask 1041409
  %v307 = vsel %vm306, %v267, %v248
  %v308 = vsel %vm306, %v305, %v286
  %vm311 = vcmask 254976
  %v312 = vsel %vm311, %v307, 0.0
  %313 = vadd.xlane.f32.xlu0 %v312
  %v314 = vpop.xlane.xlu0 %313
  %v315 = vsel %vm311, %v308, 0.0
  %316 = vadd.xlane.f32.xlu0 %v315
  %v317 = vpop.xlane.xlu0 %316
  %v318 = vmax.f32 %v314, 0.0
  %v319 = vmax.f32 %v317, 0.0
  %v320 = vmul.f32 %v318, %v37
  %v321 = vmul.f32 %v319, %v37
  %v322 = vsel %vm311, %v320, 0.0
  %v323 = vrot.slane %v322, 4
  %v324 = vadd.f32 %v322, %v323
  %v325 = vrot.slane %v324, 2
  %v326 = vadd.f32 %v324, %v325
  %v327 = vrot.slane %v326, 1
  %v328 = vadd.f32 %v326, %v327
  %v329 = vsel %vm311, %v321, 0.0
  %v330 = vrot.slane %v329, 4
  %v331 = vadd.f32 %v329, %v330
  %v332 = vrot.slane %v331, 2
  %v333 = vadd.f32 %v331, %v332
  %v334 = vrot.slane %v333, 1
  %v335 = vadd.f32 %v333, %v334
  %v336 = vmul.f32 %v73, %v102
  %v337 = vmul.f32 %v76, %v106
  %v338 = vmul.f32 %v79, %v110
  %v339 = vmul.f32 %v82, %v114
  %v340 = vmul.f32 %v73, %v121
  %v341 = vmul.f32 %v76, %v125
  %v342 = vmul.f32 %v79, %v129
  %v343 = vmul.f32 %v82, %v133
  %v344 = vmul.f32 %v85, %v102
  %v345 = vmul.f32 %v88, %v106
  %v346 = vmul.f32 %v91, %v110
  %v347 = vmul.f32 %v94, %v114
  %v348 = vmul.f32 %v85, %v121
  %v349 = vmul.f32 %v88, %v125
  %v350 = vmul.f32 %v91, %v129
  %v351 = vmul.f32 %v94, %v133
  %368 = vset.pattern.permute.xlu0 0
  %369 = vperm.xlu0 %368, %v336
  %v370 = vpop.permute.xlu0 %369
  %371 = vset.pattern.permute.xlu0 0
  %372 = vperm.xlu0 %371, %v337
  %v373 = vpop.permute.xlu0 %372
  %374 = vset.pattern.permute.xlu0 0
  %375 = vperm.xlu0 %374, %v338
  %v376 = vpop.permute.xlu0 %375
  %377 = vset.pattern.permute.xlu0 0
  %378 = vperm.xlu0 %377, %v339
  %v379 = vpop.permute.xlu0 %378
  %380 = vset.pattern.permute.xlu0 0
  %381 = vperm.xlu0 %380, %v340
  %v382 = vpop.permute.xlu0 %381
  %383 = vset.pattern.permute.xlu0 0
  %384 = vperm.xlu0 %383, %v341
  %v385 = vpop.permute.xlu0 %384
  %386 = vset.pattern.permute.xlu0 0
  %387 = vperm.xlu0 %386, %v342
  %v388 = vpop.permute.xlu0 %387
  %389 = vset.pattern.permute.xlu0 0
  %390 = vperm.xlu0 %389, %v343
  %v391 = vpop.permute.xlu0 %390
  %392 = vset.pattern.permute.xlu0 0
  %393 = vperm.xlu0 %392, %v344
  %v394 = vpop.permute.xlu0 %393
  %395 = vset.pattern.permute.xlu0 0
  %396 = vperm.xlu0 %395, %v345
  %v397 = vpop.permute.xlu0 %396
  %398 = vset.pattern.permute.xlu0 0
  %399 = vperm.xlu0 %398, %v346
  %v400 = vpop.permute.xlu0 %399
  %401 = vset.pattern.permute.xlu0 0
  %402 = vperm.xlu0 %401, %v347
  %v403 = vpop.permute.xlu0 %402
  %404 = vset.pattern.permute.xlu0 0
  %405 = vperm.xlu0 %404, %v348
  %v406 = vpop.permute.xlu0 %405
  %407 = vset.pattern.permute.xlu0 0
  %408 = vperm.xlu0 %407, %v349
  %v409 = vpop.permute.xlu0 %408
  %410 = vset.pattern.permute.xlu0 0
  %411 = vperm.xlu0 %410, %v350
  %v412 = vpop.permute.xlu0 %411
  %413 = vset.pattern.permute.xlu0 0
  %414 = vperm.xlu0 %413, %v351
  %v415 = vpop.permute.xlu0 %414
  %v416 = vlaneseq
  %v417 = vshrl.u32 %v416, 7
  %v418 = vsub.s32 %v223, %v417
  %v419 = vrot.slane %v370, %v418
  %v420 = vlaneseq
  %v421 = vshrl.u32 %v420, 7
  %v422 = vsub.s32 %v228, %v421
  %v423 = vrot.slane %v373, %v422
  %v424 = vsel %vm233, %v423, %v419
  %v425 = vlaneseq
  %v426 = vshrl.u32 %v425, 7
  %v427 = vsub.s32 %v235, %v426
  %v428 = vrot.slane %v376, %v427
  %v429 = vsel %vm240, %v428, %v424
  %v430 = vlaneseq
  %v431 = vshrl.u32 %v430, 7
  %v432 = vsub.s32 %v242, %v431
  %v433 = vrot.slane %v379, %v432
  %v434 = vsel %vm247, %v433, %v429
  %v435 = vlaneseq
  %v436 = vshrl.u32 %v435, 7
  %v437 = vsub.s32 %v223, %v436
  %v438 = vrot.slane %v382, %v437
  %v439 = vlaneseq
  %v440 = vshrl.u32 %v439, 7
  %v441 = vsub.s32 %v228, %v440
  %v442 = vrot.slane %v385, %v441
  %v443 = vsel %vm233, %v442, %v438
  %v444 = vlaneseq
  %v445 = vshrl.u32 %v444, 7
  %v446 = vsub.s32 %v235, %v445
  %v447 = vrot.slane %v388, %v446
  %v448 = vsel %vm240, %v447, %v443
  %v449 = vlaneseq
  %v450 = vshrl.u32 %v449, 7
  %v451 = vsub.s32 %v242, %v450
  %v452 = vrot.slane %v391, %v451
  %v453 = vsel %vm247, %v452, %v448
  %v454 = vlaneseq
  %v455 = vshrl.u32 %v454, 7
  %v456 = vsub.s32 %v223, %v455
  %v457 = vrot.slane %v394, %v456
  %v458 = vlaneseq
  %v459 = vshrl.u32 %v458, 7
  %v460 = vsub.s32 %v228, %v459
  %v461 = vrot.slane %v397, %v460
  %v462 = vsel %vm233, %v461, %v457
  %v463 = vlaneseq
  %v464 = vshrl.u32 %v463, 7
  %v465 = vsub.s32 %v235, %v464
  %v466 = vrot.slane %v400, %v465
  %v467 = vsel %vm240, %v466, %v462
  %v468 = vlaneseq
  %v469 = vshrl.u32 %v468, 7
  %v470 = vsub.s32 %v242, %v469
  %v471 = vrot.slane %v403, %v470
  %v472 = vsel %vm247, %v471, %v467
  %v473 = vlaneseq
  %v474 = vshrl.u32 %v473, 7
  %v475 = vsub.s32 %v223, %v474
  %v476 = vrot.slane %v406, %v475
  %v477 = vlaneseq
  %v478 = vshrl.u32 %v477, 7
  %v479 = vsub.s32 %v228, %v478
  %v480 = vrot.slane %v409, %v479
  %v481 = vsel %vm233, %v480, %v476
  %v482 = vlaneseq
  %v483 = vshrl.u32 %v482, 7
  %v484 = vsub.s32 %v235, %v483
  %v485 = vrot.slane %v412, %v484
  %v486 = vsel %vm240, %v485, %v481
  %v487 = vlaneseq
  %v488 = vshrl.u32 %v487, 7
  %v489 = vsub.s32 %v242, %v488
  %v490 = vrot.slane %v415, %v489
  %v491 = vsel %vm247, %v490, %v486
  %v492 = vsel %vm306, %v453, %v434
  %v493 = vsel %vm306, %v491, %v472
  %v496 = vsel %vm311, %v492, 0.0
  %497 = vadd.xlane.f32.xlu0 %v496
  %v498 = vpop.xlane.xlu0 %497
  %v499 = vsel %vm311, %v493, 0.0
  %500 = vadd.xlane.f32.xlu0 %v499
  %v501 = vpop.xlane.xlu0 %500
  %v502 = vmax.f32 %v498, 0.0
  %v503 = vmax.f32 %v501, 0.0
  %v504 = vmul.f32 %v502, %v37
  %v505 = vmul.f32 %v503, %v37
  %v506 = vsel %vm311, %v504, 0.0
  %v507 = vrot.slane %v506, 4
  %v508 = vadd.f32 %v506, %v507
  %v509 = vrot.slane %v508, 2
  %v510 = vadd.f32 %v508, %v509
  %v511 = vrot.slane %v510, 1
  %v512 = vadd.f32 %v510, %v511
  %v513 = vsel %vm311, %v505, 0.0
  %v514 = vrot.slane %v513, 4
  %v515 = vadd.f32 %v513, %v514
  %v516 = vrot.slane %v515, 2
  %v517 = vadd.f32 %v515, %v516
  %v518 = vrot.slane %v517, 1
  %v519 = vadd.f32 %v517, %v518
  %v520 = vadd.f32 %v328, %v512
  %v521 = vadd.f32 %v335, %v519
  %v522 = vxor.u32 %v520, 2147483648
  %v523 = vxor.u32 %v521, 2147483648
  %v524 = vmul.f32 %v522, 1.442695
  %v525 = vpow.pop %v524
  %v526 = vmul.f32 %v523, 1.442695
  %v527 = vpow.pop %v526
  %v528 = vadd.f32 %v525, 1.0
  %v529 = vadd.f32 %v527, 1.0
  %v530 = vrcp.pop %v528
  %v531 = vmul.f32 1.0, %v530
  %v532 = vrcp.pop %v529
  %v533 = vmul.f32 1.0, %v532
  %535 = vbcast.lane.b32.xlu0 %v531, 256
  %v536 = vpop.permute.xlu0 %535
  %s538 = sor.u32 256, 8
  %539 = vbcast.lane.b32.xlu0 %v531, %s538
  %v540 = vpop.permute.xlu0 %539
  %s542 = sor.u32 256, 16
  %543 = vbcast.lane.b32.xlu0 %v531, %s542
  %v544 = vpop.permute.xlu0 %543
  %s546 = sor.u32 256, 24
  %547 = vbcast.lane.b32.xlu0 %v531, %s546
  %v548 = vpop.permute.xlu0 %547
  %550 = vbcast.lane.b32.xlu0 %v533, 256
  %v551 = vpop.permute.xlu0 %550
  %s553 = sor.u32 256, 8
  %554 = vbcast.lane.b32.xlu0 %v533, %s553
  %v555 = vpop.permute.xlu0 %554
  %s557 = sor.u32 256, 16
  %558 = vbcast.lane.b32.xlu0 %v533, %s557
  %v559 = vpop.permute.xlu0 %558
  %s561 = sor.u32 256, 24
  %562 = vbcast.lane.b32.xlu0 %v533, %s561
  %v563 = vpop.permute.xlu0 %562
  %v564 = vmul.f32 %v20, %v536
  %v565 = vmul.f32 %v21, %v536
  %v566 = vmul.f32 %v22, %v540
  %v567 = vmul.f32 %v23, %v540
  %v568 = vmul.f32 %v24, %v544
  %v569 = vmul.f32 %v25, %v544
  %v570 = vmul.f32 %v26, %v548
  %v571 = vmul.f32 %v27, %v548
  %v572 = vmul.f32 %v28, %v551
  %v573 = vmul.f32 %v29, %v551
  %v574 = vmul.f32 %v30, %v555
  %v575 = vmul.f32 %v31, %v555
  %v576 = vmul.f32 %v32, %v559
  %v577 = vmul.f32 %v33, %v559
  %v578 = vmul.f32 %v34, %v563
  %v579 = vmul.f32 %v35, %v563
  %v580 = vadd.f32 %v564, %v566
  %v581 = vadd.f32 %v580, %v568
  %v582 = vadd.f32 %v581, %v570
  %v583 = vrot.slane %v582, 4
  %v584 = vadd.f32 %v582, %v583
  %v585 = vrot.slane %v584, 2
  %v586 = vadd.f32 %v584, %v585
  %v587 = vrot.slane %v586, 1
  %v588 = vadd.f32 %v586, %v587
  %v589 = vadd.f32 %v565, %v567
  %v590 = vadd.f32 %v589, %v569
  %v591 = vadd.f32 %v590, %v571
  %v592 = vrot.slane %v591, 4
  %v593 = vadd.f32 %v591, %v592
  %v594 = vrot.slane %v593, 2
  %v595 = vadd.f32 %v593, %v594
  %v596 = vrot.slane %v595, 1
  %v597 = vadd.f32 %v595, %v596
  %v598 = vadd.f32 %v572, %v574
  %v599 = vadd.f32 %v598, %v576
  %v600 = vadd.f32 %v599, %v578
  %v601 = vrot.slane %v600, 4
  %v602 = vadd.f32 %v600, %v601
  %v603 = vrot.slane %v602, 2
  %v604 = vadd.f32 %v602, %v603
  %v605 = vrot.slane %v604, 1
  %v606 = vadd.f32 %v604, %v605
  %v607 = vadd.f32 %v573, %v575
  %v608 = vadd.f32 %v607, %v577
  %v609 = vadd.f32 %v608, %v579
  %v610 = vrot.slane %v609, 4
  %v611 = vadd.f32 %v609, %v610
  %v612 = vrot.slane %v611, 2
  %v613 = vadd.f32 %v611, %v612
  %v614 = vrot.slane %v613, 1
  %v615 = vadd.f32 %v613, %v614
  %v616 = vrcp.pop 32.0
  %v617 = vmul.f32 %v588, %v616
  %v618 = vmul.f32 %v597, %v616
  %v619 = vmul.f32 %v606, %v616
  %v620 = vmul.f32 %v615, %v616
  %v621 = vmax.f32 %v564, %v566
  %v622 = vmax.f32 %v621, %v568
  %v623 = vmax.f32 %v622, %v570
  %v624 = vrot.slane %v623, 4
  %v625 = vmax.f32 %v623, %v624
  %v626 = vrot.slane %v625, 2
  %v627 = vmax.f32 %v625, %v626
  %v628 = vrot.slane %v627, 1
  %v629 = vmax.f32 %v627, %v628
  %v630 = vmax.f32 %v565, %v567
  %v631 = vmax.f32 %v630, %v569
  %v632 = vmax.f32 %v631, %v571
  %v633 = vrot.slane %v632, 4
  %v634 = vmax.f32 %v632, %v633
  %v635 = vrot.slane %v634, 2
  %v636 = vmax.f32 %v634, %v635
  %v637 = vrot.slane %v636, 1
  %v638 = vmax.f32 %v636, %v637
  %v639 = vmax.f32 %v572, %v574
  %v640 = vmax.f32 %v639, %v576
  %v641 = vmax.f32 %v640, %v578
  %v642 = vrot.slane %v641, 4
  %v643 = vmax.f32 %v641, %v642
  %v644 = vrot.slane %v643, 2
  %v645 = vmax.f32 %v643, %v644
  %v646 = vrot.slane %v645, 1
  %v647 = vmax.f32 %v645, %v646
  %v648 = vmax.f32 %v573, %v575
  %v649 = vmax.f32 %v648, %v577
  %v650 = vmax.f32 %v649, %v579
  %v651 = vrot.slane %v650, 4
  %v652 = vmax.f32 %v650, %v651
  %v653 = vrot.slane %v652, 2
  %v654 = vmax.f32 %v652, %v653
  %v655 = vrot.slane %v654, 1
  %v656 = vmax.f32 %v654, %v655
  %v657 = vld [vmem:[%s3] sm:$0xff]
  %v658 = vld [vmem:[%s3 + $0x8] sm:$0xff]
  %v659 = vld [vmem:[%s3 + $0x10] sm:$0xff]
  %v660 = vld [vmem:[%s3 + $0x18] sm:$0xff]
  %v661 = vld [vmem:[%s3 + $0x20] sm:$0xff]
  %v662 = vld [vmem:[%s3 + $0x28] sm:$0xff]
  %v663 = vld [vmem:[%s3 + $0x30] sm:$0xff]
  %v664 = vld [vmem:[%s3 + $0x38] sm:$0xff]
  %v665 = vld [vmem:[%s3 + $0x40] sm:$0xff]
  %v666 = vld [vmem:[%s3 + $0x48] sm:$0xff]
  %v667 = vld [vmem:[%s3 + $0x50] sm:$0xff]
  %v668 = vld [vmem:[%s3 + $0x58] sm:$0xff]
  %v669 = vld [vmem:[%s3 + $0x60] sm:$0xff]
  %v670 = vld [vmem:[%s3 + $0x68] sm:$0xff]
  %v671 = vld [vmem:[%s3 + $0x70] sm:$0xff]
  %v672 = vld [vmem:[%s3 + $0x78] sm:$0xff]
  %v673 = vld [vmem:[%s3 + $0x80] sm:$0xff]
  %v674 = vld [vmem:[%s3 + $0x88] sm:$0xff]
  %v675 = vld [vmem:[%s3 + $0x90] sm:$0xff]
  %v676 = vld [vmem:[%s3 + $0x98] sm:$0xff]
  %v677 = vld [vmem:[%s3 + $0xa0] sm:$0xff]
  %v678 = vld [vmem:[%s3 + $0xa8] sm:$0xff]
  %v679 = vld [vmem:[%s3 + $0xb0] sm:$0xff]
  %v680 = vld [vmem:[%s3 + $0xb8] sm:$0xff]
  %v681 = vld [vmem:[%s3 + $0xc0] sm:$0xff]
  %v682 = vld [vmem:[%s3 + $0xc8] sm:$0xff]
  %v683 = vld [vmem:[%s3 + $0xd0] sm:$0xff]
  %v684 = vld [vmem:[%s3 + $0xd8] sm:$0xff]
  %v685 = vld [vmem:[%s3 + $0xe0] sm:$0xff]
  %v686 = vld [vmem:[%s3 + $0xe8] sm:$0xff]
  %v687 = vld [vmem:[%s3 + $0xf0] sm:$0xff]
  %v688 = vld [vmem:[%s3 + $0xf8] sm:$0xff]
  %v689 = vld [vmem:[%s3 + $0x100] sm:$0xff]
  %v690 = vld [vmem:[%s3 + $0x108] sm:$0xff]
  %v691 = vld [vmem:[%s3 + $0x110] sm:$0xff]
  %v692 = vld [vmem:[%s3 + $0x118] sm:$0xff]
  %v693 = vld [vmem:[%s3 + $0x120] sm:$0xff]
  %v694 = vld [vmem:[%s3 + $0x128] sm:$0xff]
  %v695 = vld [vmem:[%s3 + $0x130] sm:$0xff]
  %v696 = vld [vmem:[%s3 + $0x138] sm:$0xff]
  %v697 = vld [vmem:[%s3 + $0x140] sm:$0xff]
  %v698 = vld [vmem:[%s3 + $0x148] sm:$0xff]
  %v699 = vld [vmem:[%s3 + $0x150] sm:$0xff]
  %v700 = vld [vmem:[%s3 + $0x158] sm:$0xff]
  %v701 = vld [vmem:[%s3 + $0x160] sm:$0xff]
  %v702 = vld [vmem:[%s3 + $0x168] sm:$0xff]
  %v703 = vld [vmem:[%s3 + $0x170] sm:$0xff]
  %v704 = vld [vmem:[%s3 + $0x178] sm:$0xff]
  %v705 = vld [vmem:[%s3 + $0x180] sm:$0xff]
  %v706 = vld [vmem:[%s3 + $0x188] sm:$0xff]
  %v707 = vld [vmem:[%s3 + $0x190] sm:$0xff]
  %v708 = vld [vmem:[%s3 + $0x198] sm:$0xff]
  %v709 = vld [vmem:[%s3 + $0x1a0] sm:$0xff]
  %v710 = vld [vmem:[%s3 + $0x1a8] sm:$0xff]
  %v711 = vld [vmem:[%s3 + $0x1b0] sm:$0xff]
  %v712 = vld [vmem:[%s3 + $0x1b8] sm:$0xff]
  %v713 = vld [vmem:[%s3 + $0x1c0] sm:$0xff]
  %v714 = vld [vmem:[%s3 + $0x1c8] sm:$0xff]
  %v715 = vld [vmem:[%s3 + $0x1d0] sm:$0xff]
  %v716 = vld [vmem:[%s3 + $0x1d8] sm:$0xff]
  %v717 = vld [vmem:[%s3 + $0x1e0] sm:$0xff]
  %v718 = vld [vmem:[%s3 + $0x1e8] sm:$0xff]
  %v719 = vld [vmem:[%s3 + $0x1f0] sm:$0xff]
  %v720 = vld [vmem:[%s3 + $0x1f8] sm:$0xff]
  %v721 = vld [vmem:[%s4] sm:$0xff]
  %v722 = vld [vmem:[%s4 + $0x8] sm:$0xff]
  %v723 = vld [vmem:[%s4 + $0x10] sm:$0xff]
  %v724 = vld [vmem:[%s4 + $0x18] sm:$0xff]
  %v725 = vld [vmem:[%s4 + $0x20] sm:$0xff]
  %v726 = vld [vmem:[%s4 + $0x28] sm:$0xff]
  %v727 = vld [vmem:[%s4 + $0x30] sm:$0xff]
  %v728 = vld [vmem:[%s4 + $0x38] sm:$0xff]
  %v729 = vld [vmem:[%s4 + $0x40] sm:$0xff]
  %v730 = vld [vmem:[%s4 + $0x48] sm:$0xff]
  %v731 = vld [vmem:[%s4 + $0x50] sm:$0xff]
  %v732 = vld [vmem:[%s4 + $0x58] sm:$0xff]
  %v733 = vld [vmem:[%s4 + $0x60] sm:$0xff]
  %v734 = vld [vmem:[%s4 + $0x68] sm:$0xff]
  %v735 = vld [vmem:[%s4 + $0x70] sm:$0xff]
  %v736 = vld [vmem:[%s4 + $0x78] sm:$0xff]
  %v737 = vld [vmem:[%s4 + $0x80] sm:$0xff]
  %v738 = vld [vmem:[%s4 + $0x88] sm:$0xff]
  %v739 = vld [vmem:[%s4 + $0x90] sm:$0xff]
  %v740 = vld [vmem:[%s4 + $0x98] sm:$0xff]
  %v741 = vld [vmem:[%s4 + $0xa0] sm:$0xff]
  %v742 = vld [vmem:[%s4 + $0xa8] sm:$0xff]
  %v743 = vld [vmem:[%s4 + $0xb0] sm:$0xff]
  %v744 = vld [vmem:[%s4 + $0xb8] sm:$0xff]
  %v745 = vld [vmem:[%s4 + $0xc0] sm:$0xff]
  %v746 = vld [vmem:[%s4 + $0xc8] sm:$0xff]
  %v747 = vld [vmem:[%s4 + $0xd0] sm:$0xff]
  %v748 = vld [vmem:[%s4 + $0xd8] sm:$0xff]
  %v749 = vld [vmem:[%s4 + $0xe0] sm:$0xff]
  %v750 = vld [vmem:[%s4 + $0xe8] sm:$0xff]
  %v751 = vld [vmem:[%s4 + $0xf0] sm:$0xff]
  %v752 = vld [vmem:[%s4 + $0xf8] sm:$0xff]
  %v753 = vld [vmem:[%s4 + $0x100] sm:$0xff]
  %v754 = vld [vmem:[%s4 + $0x108] sm:$0xff]
  %v755 = vld [vmem:[%s4 + $0x110] sm:$0xff]
  %v756 = vld [vmem:[%s4 + $0x118] sm:$0xff]
  %v757 = vld [vmem:[%s4 + $0x120] sm:$0xff]
  %v758 = vld [vmem:[%s4 + $0x128] sm:$0xff]
  %v759 = vld [vmem:[%s4 + $0x130] sm:$0xff]
  %v760 = vld [vmem:[%s4 + $0x138] sm:$0xff]
  %v761 = vld [vmem:[%s4 + $0x140] sm:$0xff]
  %v762 = vld [vmem:[%s4 + $0x148] sm:$0xff]
  %v763 = vld [vmem:[%s4 + $0x150] sm:$0xff]
  %v764 = vld [vmem:[%s4 + $0x158] sm:$0xff]
  %v765 = vld [vmem:[%s4 + $0x160] sm:$0xff]
  %v766 = vld [vmem:[%s4 + $0x168] sm:$0xff]
  %v767 = vld [vmem:[%s4 + $0x170] sm:$0xff]
  %v768 = vld [vmem:[%s4 + $0x178] sm:$0xff]
  %v769 = vld [vmem:[%s4 + $0x180] sm:$0xff]
  %v770 = vld [vmem:[%s4 + $0x188] sm:$0xff]
  %v771 = vld [vmem:[%s4 + $0x190] sm:$0xff]
  %v772 = vld [vmem:[%s4 + $0x198] sm:$0xff]
  %v773 = vld [vmem:[%s4 + $0x1a0] sm:$0xff]
  %v774 = vld [vmem:[%s4 + $0x1a8] sm:$0xff]
  %v775 = vld [vmem:[%s4 + $0x1b0] sm:$0xff]
  %v776 = vld [vmem:[%s4 + $0x1b8] sm:$0xff]
  %v777 = vld [vmem:[%s4 + $0x1c0] sm:$0xff]
  %v778 = vld [vmem:[%s4 + $0x1c8] sm:$0xff]
  %v779 = vld [vmem:[%s4 + $0x1d0] sm:$0xff]
  %v780 = vld [vmem:[%s4 + $0x1d8] sm:$0xff]
  %v781 = vld [vmem:[%s4 + $0x1e0] sm:$0xff]
  %v782 = vld [vmem:[%s4 + $0x1e8] sm:$0xff]
  %v783 = vld [vmem:[%s4 + $0x1f0] sm:$0xff]
  %v784 = vld [vmem:[%s4 + $0x1f8] sm:$0xff]
  %v789 = vsel %vm306, %v647, %v629
  %v790 = vsel %vm306, %v656, %v638
  %793 = vmatprep.subr.mxu0 %v722
  %794 = vmatpush1.msra.mxu0 %v721
  %795 = vmatprep.subr.mxu0 %v724
  %796 = vmatpush1.msra.mxu0 %v723
  %797 = vmatprep.subr.mxu0 %v726
  %798 = vmatpush1.msra.mxu0 %v725
  %799 = vmatprep.subr.mxu0 %v728
  %800 = vmatpush1.msra.mxu0 %v727
  %801 = vmatprep.subr.mxu0 %v730
  %802 = vmatpush1.msra.mxu0 %v729
  %803 = vmatprep.subr.mxu0 %v732
  %804 = vmatpush1.msra.mxu0 %v731
  %805 = vmatprep.subr.mxu0 %v734
  %806 = vmatpush1.msra.mxu0 %v733
  %807 = vmatprep.subr.mxu0 %v736
  %808 = vmatpush1.msra.mxu0 %v735
  %809 = vmatprep.subr.mxu0 %v738
  %810 = vmatpush1.msra.mxu0 %v737
  %811 = vmatprep.subr.mxu0 %v740
  %812 = vmatpush1.msra.mxu0 %v739
  %813 = vmatprep.subr.mxu0 %v742
  %814 = vmatpush1.msra.mxu0 %v741
  %815 = vmatprep.subr.mxu0 %v744
  %816 = vmatpush1.msra.mxu0 %v743
  %817 = vmatprep.subr.mxu0 %v746
  %818 = vmatpush1.msra.mxu0 %v745
  %819 = vmatprep.subr.mxu0 %v748
  %820 = vmatpush1.msra.mxu0 %v747
  %821 = vmatprep.subr.mxu0 %v750
  %822 = vmatpush1.msra.mxu0 %v749
  %823 = vmatprep.subr.mxu0 %v752
  %824 = vmatpush1.msra.mxu0 %v751
  %825 = vmatprep.subr.mxu0 %v754
  %826 = vmatpush1.msra.mxu0 %v753
  %827 = vmatprep.subr.mxu0 %v756
  %828 = vmatpush1.msra.mxu0 %v755
  %829 = vmatprep.subr.mxu0 %v758
  %830 = vmatpush1.msra.mxu0 %v757
  %831 = vmatprep.subr.mxu0 %v760
  %832 = vmatpush1.msra.mxu0 %v759
  %833 = vmatprep.subr.mxu0 %v762
  %834 = vmatpush1.msra.mxu0 %v761
  %835 = vmatprep.subr.mxu0 %v764
  %836 = vmatpush1.msra.mxu0 %v763
  %837 = vmatprep.subr.mxu0 %v766
  %838 = vmatpush1.msra.mxu0 %v765
  %839 = vmatprep.subr.mxu0 %v768
  %840 = vmatpush1.msra.mxu0 %v767
  %841 = vmatprep.subr.mxu0 %v770
  %842 = vmatpush1.msra.mxu0 %v769
  %843 = vmatprep.subr.mxu0 %v772
  %844 = vmatpush1.msra.mxu0 %v771
  %845 = vmatprep.subr.mxu0 %v774
  %846 = vmatpush1.msra.mxu0 %v773
  %847 = vmatprep.subr.mxu0 %v776
  %848 = vmatpush1.msra.mxu0 %v775
  %849 = vmatprep.subr.mxu0 %v778
  %850 = vmatpush1.msra.mxu0 %v777
  %851 = vmatprep.subr.mxu0 %v780
  %852 = vmatpush1.msra.mxu0 %v779
  %853 = vmatprep.subr.mxu0 %v782
  %854 = vmatpush1.msra.mxu0 %v781
  %855 = vmatprep.subr.mxu0 %v784
  %856 = vmatpush1.msra.mxu0 %v783
  %857 = vmatprep.mubr.f32.mxu0 %v790
  %858 = vmatmul.mubr.f32.gmra.mrb[0].mxu0 %v789
  %v859 = vpop.f32.mrb[0].mxu0
  %v860 = vadd.f32 0.0, %v859
  %v861 = vpop.f32.mrb[0].mxu0
  %v862 = vadd.f32 0.0, %v861
  %863 = vdwg.mxu0
  %v868 = vsel %vm306, %v619, %v617
  %v869 = vsel %vm306, %v620, %v618
  %872 = vmatprep.subr.mxu0 %v658
  %873 = vmatpush1.msra.mxu0 %v657
  %874 = vmatprep.subr.mxu0 %v660
  %875 = vmatpush1.msra.mxu0 %v659
  %876 = vmatprep.subr.mxu0 %v662
  %877 = vmatpush1.msra.mxu0 %v661
  %878 = vmatprep.subr.mxu0 %v664
  %879 = vmatpush1.msra.mxu0 %v663
  %880 = vmatprep.subr.mxu0 %v666
  %881 = vmatpush1.msra.mxu0 %v665
  %882 = vmatprep.subr.mxu0 %v668
  %883 = vmatpush1.msra.mxu0 %v667
  %884 = vmatprep.subr.mxu0 %v670
  %885 = vmatpush1.msra.mxu0 %v669
  %886 = vmatprep.subr.mxu0 %v672
  %887 = vmatpush1.msra.mxu0 %v671
  %888 = vmatprep.subr.mxu0 %v674
  %889 = vmatpush1.msra.mxu0 %v673
  %890 = vmatprep.subr.mxu0 %v676
  %891 = vmatpush1.msra.mxu0 %v675
  %892 = vmatprep.subr.mxu0 %v678
  %893 = vmatpush1.msra.mxu0 %v677
  %894 = vmatprep.subr.mxu0 %v680
  %895 = vmatpush1.msra.mxu0 %v679
  %896 = vmatprep.subr.mxu0 %v682
  %897 = vmatpush1.msra.mxu0 %v681
  %898 = vmatprep.subr.mxu0 %v684
  %899 = vmatpush1.msra.mxu0 %v683
  %900 = vmatprep.subr.mxu0 %v686
  %901 = vmatpush1.msra.mxu0 %v685
  %902 = vmatprep.subr.mxu0 %v688
  %903 = vmatpush1.msra.mxu0 %v687
  %904 = vmatprep.subr.mxu0 %v690
  %905 = vmatpush1.msra.mxu0 %v689
  %906 = vmatprep.subr.mxu0 %v692
  %907 = vmatpush1.msra.mxu0 %v691
  %908 = vmatprep.subr.mxu0 %v694
  %909 = vmatpush1.msra.mxu0 %v693
  %910 = vmatprep.subr.mxu0 %v696
  %911 = vmatpush1.msra.mxu0 %v695
  %912 = vmatprep.subr.mxu0 %v698
  %913 = vmatpush1.msra.mxu0 %v697
  %914 = vmatprep.subr.mxu0 %v700
  %915 = vmatpush1.msra.mxu0 %v699
  %916 = vmatprep.subr.mxu0 %v702
  %917 = vmatpush1.msra.mxu0 %v701
  %918 = vmatprep.subr.mxu0 %v704
  %919 = vmatpush1.msra.mxu0 %v703
  %920 = vmatprep.subr.mxu0 %v706
  %921 = vmatpush1.msra.mxu0 %v705
  %922 = vmatprep.subr.mxu0 %v708
  %923 = vmatpush1.msra.mxu0 %v707
  %924 = vmatprep.subr.mxu0 %v710
  %925 = vmatpush1.msra.mxu0 %v709
  %926 = vmatprep.subr.mxu0 %v712
  %927 = vmatpush1.msra.mxu0 %v711
  %928 = vmatprep.subr.mxu0 %v714
  %929 = vmatpush1.msra.mxu0 %v713
  %930 = vmatprep.subr.mxu0 %v716
  %931 = vmatpush1.msra.mxu0 %v715
  %932 = vmatprep.subr.mxu0 %v718
  %933 = vmatpush1.msra.mxu0 %v717
  %934 = vmatprep.subr.mxu0 %v720
  %935 = vmatpush1.msra.mxu0 %v719
  %936 = vmatprep.mubr.f32.mxu0 %v869
  %937 = vmatmul.mubr.f32.gmra.mrb[0].mxu0 %v868
  %v938 = vpop.f32.mrb[0].mxu0
  %v939 = vadd.f32 %v860, %v938
  %v940 = vpop.f32.mrb[0].mxu0
  %v941 = vadd.f32 %v862, %v940
  %942 = vdwg.mxu0
  %v943 = vxor.u32 %v939, 2147483648
  %v944 = vxor.u32 %v941, 2147483648
  %v945 = vmul.f32 %v943, 1.442695
  %v946 = vpow.pop %v945
  %v947 = vmul.f32 %v944, 1.442695
  %v948 = vpow.pop %v947
  %v949 = vadd.f32 %v946, 1.0
  %v950 = vadd.f32 %v948, 1.0
  %v951 = vrcp.pop %v949
  %v952 = vmul.f32 1.0, %v951
  %v953 = vrcp.pop %v950
  %v954 = vmul.f32 1.0, %v953
  %v957 = vcombine.low %v952, %v954
  %v959 = vunpack.c.l.s4 1966171168
  %v960 = vunpack.c.0.s8 %v959
  %v961 = vlaneseq
  %v962 = vshrl.u32 %v961, 7
  %v963 = vsub.s32 %v960, %v962
  %v964 = vrot.slane %v957, %v963
  %v965 = vcombine.high %v964, %v964
  %v967 = vunpack.c.l.s4 1966171168
  %v968 = vunpack.c.0.s8 %v967
  %v969 = vlaneseq
  %v970 = vshrl.u32 %v969, 7
  %v971 = vsub.s32 %v968, %v970
  %v972 = vrot.slane %v964, %v971
  %v974 = vunpack.c.l.s4 1966171168
  %v975 = vunpack.c.0.s8 %v974
  %v976 = vlaneseq
  %v977 = vshrl.u32 %v976, 7
  %v978 = vsub.s32 %v975, %v977
  %v979 = vrot.slane %v965, %v978
  %v980 = vlaneseq
  %v981 = vshrl.u32 %v980, 7
  %v982 = vsub.s32 0, %v981
  %v983 = vrot.slane %v972, %v982
  %v984 = vlaneseq
  %v985 = vshrl.u32 %v984, 7
  %v986 = vsub.s32 1, %v985
  %v987 = vrot.slane %v972, %v986
  %v988 = vlaneseq
  %v989 = vshrl.u32 %v988, 7
  %v990 = vsub.s32 0, %v989
  %v991 = vrot.slane %v979, %v990
  %v992 = vlaneseq
  %v993 = vshrl.u32 %v992, 7
  %v994 = vsub.s32 1, %v993
  %v995 = vrot.slane %v979, %v994
  %v1000 = vmul.f32 %v564, %v983
  %v1001 = vmul.f32 %v565, %v987
  %v1002 = vmul.f32 %v566, %v983
  %v1003 = vmul.f32 %v567, %v987
  %v1004 = vmul.f32 %v568, %v983
  %v1005 = vmul.f32 %v569, %v987
  %v1006 = vmul.f32 %v570, %v983
  %v1007 = vmul.f32 %v571, %v987
  %v1008 = vmul.f32 %v572, %v991
  %v1009 = vmul.f32 %v573, %v995
  %v1010 = vmul.f32 %v574, %v991
  %v1011 = vmul.f32 %v575, %v995
  %v1012 = vmul.f32 %v576, %v991
  %v1013 = vmul.f32 %v577, %v995
  %v1014 = vmul.f32 %v578, %v991
  %v1015 = vmul.f32 %v579, %v995
  %1016 = vst [vmem:[%s5] sm:$0xff] %v1000
  %1017 = vst [vmem:[%s5 + $0x8] sm:$0xff] %v1001
  %1018 = vst [vmem:[%s5 + $0x10] sm:$0xff] %v1002
  %1019 = vst [vmem:[%s5 + $0x18] sm:$0xff] %v1003
  %1020 = vst [vmem:[%s5 + $0x20] sm:$0xff] %v1004
  %1021 = vst [vmem:[%s5 + $0x28] sm:$0xff] %v1005
  %1022 = vst [vmem:[%s5 + $0x30] sm:$0xff] %v1006
  %1023 = vst [vmem:[%s5 + $0x38] sm:$0xff] %v1007
  %1024 = vst [vmem:[%s5 + $0x40] sm:$0xff] %v1008
  %1025 = vst [vmem:[%s5 + $0x48] sm:$0xff] %v1009
  %1026 = vst [vmem:[%s5 + $0x50] sm:$0xff] %v1010
  %1027 = vst [vmem:[%s5 + $0x58] sm:$0xff] %v1011
  %1028 = vst [vmem:[%s5 + $0x60] sm:$0xff] %v1012
  %1029 = vst [vmem:[%s5 + $0x68] sm:$0xff] %v1013
  %1030 = vst [vmem:[%s5 + $0x70] sm:$0xff] %v1014
  %1031 = vst [vmem:[%s5 + $0x78] sm:$0xff] %v1015
  // Predicated region
  $region22: #{cbam_forward.1} parent=0 // pred_check
    _
  $region23: #{cbam_forward.1} parent=0 // pred_check_branch
    %1033 = sbr.rel (0) target = $region25
  $region24: #{cbam_forward.1} parent=0 // pred_region
    _
  $region25: #{cbam_forward.1} parent=0 // pred_fallthru
    _
  // Predicated region
  $region26: #{cbam_forward.1} parent=0 // pred_check
    _
  $region27: #{cbam_forward.1} parent=0 // pred_check_branch
    %1035 = sbr.rel (0) target = $region29
  $region28: #{cbam_forward.1} parent=0 // pred_region
    _
  $region29: #{cbam_forward.1} parent=0 // pred_fallthru
    _

</llo_original>
